<compile_context>
chip_gen: v7x
topology: tpu7x:2x2x1
jax: 0.10.0
libtpu: 0.0.40
codegen_flags: <defaults>
</compile_context>

<pallas_src>
import jax
import jax.numpy as jnp
from jax.experimental import pallas as pl
from jax.experimental.pallas import tpu as pltpu

_LANE = 128
_MAX_BLOCK_ELEMS = 8192 * 128   # ~4 MiB per f32 block (2 MiB for bf16)
_SINGLE_BLOCK_ELEMS = 1024 * 128  # below this, just use one full-array block


def _swish_kernel(x_ref, o_ref):
    # Compute in f32 for accuracy, cast back to the output dtype.
    xf = x_ref[...].astype(jnp.float32)
    # x * sigmoid(x). For huge negative finite x: exp(-x)=inf -> sig=0 -> -0.0,
    # matching torch; x = -inf gives NaN in torch as well (0 * -inf).
    sig = 1.0 / (1.0 + jnp.exp(-xf))
    o_ref[...] = (xf * sig).astype(o_ref.dtype)


def _choose_cols(n: int):
    """Widest lane-multiple last dim that divides n (copy-free); else pad."""
    for cols in (1024, 512, 256, _LANE):
        if n % cols == 0:
            return cols, 0
    return _LANE, (-n) % _LANE


def swish(x: jax.Array) -> jax.Array:
    """Elementwise Swish: x * sigmoid(x). Matches torch x.mul(x.sigmoid())."""
    orig_shape = x.shape
    orig_dtype = x.dtype
    n = x.size
    if n == 0:
        return x

    cols, pad = _choose_cols(n)
    x_flat = x.reshape(-1)
    if pad:
        # Fallback (rare for conv activations): pad once so the flat array
        # reshapes to (rows, 128). Common path (pad == 0) is copy-free.
        x_flat = jnp.pad(x_flat, (0, pad))
    rows = (n + pad) // cols
    x2d = x_flat.reshape(rows, cols)

    # Block sizing:
    #   - small inputs: one full-array block (block dims == array dims, so the
    #     (8, 128) divisibility rule does not apply).
    #   - otherwise: >= 2 blocks (helps v7x's 2 TensorCores), each a multiple
    #     of 8 rows and capped at ~4 MiB f32. A partial last block is masked
    #     by Pallas, so no row padding is needed.
    if rows * cols <= _SINGLE_BLOCK_ELEMS:
        tile_rows = rows
    else:
        half = -(-rows // 2)                       # ceil(rows / 2)
        half8 = ((half + 7) // 8) * 8              # round up to sublane mult
        cap = max(8, (_MAX_BLOCK_ELEMS // cols) // 8 * 8)
        tile_rows = min(cap, half8)

    grid = (pl.cdiv(rows, tile_rows),)

    out2d = pl.pallas_call(
        _swish_kernel,
        out_shape=jax.ShapeDtypeStruct((rows, cols), orig_dtype),
        grid_spec=pltpu.PrefetchScalarGridSpec(
            num_scalar_prefetch=0,
            grid=grid,
            in_specs=[pl.BlockSpec((tile_rows, cols), lambda i: (i, 0))],
            out_specs=pl.BlockSpec((tile_rows, cols), lambda i: (i, 0)),
        ),
        compiler_params=pltpu.CompilerParams(
            dimension_semantics=("parallel",),
            vmem_limit_bytes=32 << 20,
        ),
    )(x2d)

    out_flat = out2d.reshape(-1)
    if pad:
        out_flat = out_flat[:n]
    return out_flat.reshape(orig_shape)


if __name__ == "__main__":
    key = jax.random.PRNGKey(0)

    # Primary check: NCHW input consistent with the conv-net context.
    x = jax.random.normal(key, (2, 4, 16, 16), dtype=jnp.float32)
    y = swish(x)
    jax.block_until_ready(y)
    ref = x * jax.nn.sigmoid(x)
    assert y.shape == x.shape and y.dtype == x.dtype
    assert jnp.max(jnp.abs(y - ref)) < 1e-5

    # Multi-block path (elems > single-block threshold -> 2 parallel steps).
    k1, k2, k3 = jax.random.split(key, 3)
    x_big = jax.random.normal(k1, (1, 16, 128, 128), dtype=jnp.float32)
    y_big = swish(x_big)
    jax.block_until_ready(y_big)
    assert jnp.max(jnp.abs(y_big - x_big * jax.nn.sigmoid(x_big))) < 1e-5

    # Ragged fallback path (numel not a multiple of 128).
    x_odd = jax.random.normal(k2, (3, 5, 7, 11), dtype=jnp.float32)
    y_odd = swish(x_odd)
    jax.block_until_ready(y_odd)
    assert jnp.max(jnp.abs(y_odd - x_odd * jax.nn.sigmoid(x_odd))) < 1e-5

    # bf16 path (f32 internal compute, cast back).
    x_bf = jax.random.normal(k3, (2, 8, 16, 16), dtype=jnp.bfloat16)
    y_bf = swish(x_bf)
    jax.block_until_ready(y_bf)
    ref_bf = (x_bf.astype(jnp.float32) * jax.nn.sigmoid(x_bf.astype(jnp.float32))).astype(jnp.bfloat16)
    assert y_bf.dtype == jnp.bfloat16
    assert jnp.max(jnp.abs(y_bf.astype(jnp.float32) - ref_bf.astype(jnp.float32))) < 2e-2

    print("KERNEL_OK")
</pallas_src>

<mosaic_0001>
module attributes {stable_mosaic.version = 11 : i64} {
  func.func @_swish_kernel(%arg0: i32, %arg1: memref<2x1024xf32, #tpu.memory_space<vmem>>, %arg2: memref<2x1024xf32, #tpu.memory_space<vmem>>) attributes {dimension_semantics = [#tpu.dimension_semantics<parallel>], iteration_bounds = array<i64: 1>, scalar_prefetch = 0 : i64, scratch_operands = 0 : i64, tpu.core_type = #tpu.core_type<tc>, window_params = [{transform_indices = @transform_0, window_bounds = array<i64: 2, 1024>}, {transform_indices = @transform_1, window_bounds = array<i64: 2, 1024>}]} {
    %c0 = arith.constant 0 : index
    %c0_0 = arith.constant 0 : index
    %0 = vector.load %arg1[%c0, %c0_0] : memref<2x1024xf32, #tpu.memory_space<vmem>>, vector<2x1024xf32>
    %cst = arith.constant 0.000000e+00 : f32
    %1 = vector.broadcast %cst : f32 to vector<2x1024xf32>
    %2 = arith.subf %1, %0 : vector<2x1024xf32>
    %3 = math.exp %2 : vector<2x1024xf32>
    %cst_1 = arith.constant 1.000000e+00 : f32
    %4 = vector.broadcast %cst_1 : f32 to vector<2x1024xf32>
    %5 = arith.addf %4, %3 : vector<2x1024xf32>
    %cst_2 = arith.constant 1.000000e+00 : f32
    %6 = vector.broadcast %cst_2 : f32 to vector<2x1024xf32>
    %7 = arith.divf %6, %5 : vector<2x1024xf32>
    %8 = arith.mulf %0, %7 : vector<2x1024xf32>
    %c0_3 = arith.constant 0 : index
    %c0_4 = arith.constant 0 : index
    %9 = vector.load %arg2[%c0_3, %c0_4] : memref<2x1024xf32, #tpu.memory_space<vmem>>, vector<2x1024xf32>
    tpu.vector_store %arg2[%c0_3, %c0_4], %8 {strides = array<i32>} : memref<2x1024xf32, #tpu.memory_space<vmem>>, vector<2x1024xf32>,
    return
  }
  func.func @transform_0(%arg0: i32) -> (i32, i32) {
    %c0_i32 = arith.constant 0 : i32
    %c0_i32_0 = arith.constant 0 : i32
    return %arg0, %c0_i32 : i32, i32
  }
  func.func @transform_1(%arg0: i32) -> (i32, i32) {
    %c0_i32 = arith.constant 0 : i32
    %c0_i32_0 = arith.constant 0 : i32
    return %arg0, %c0_i32 : i32, i32
  }
}

</mosaic_0001>

<llo_original>
// kernel: tpu_custom_call.1
$region0: #{tpu_custom_call.1}
  #allocation0 [shape = 'u32[]', space=smem, size = 0x4, offset = 0x4, fixed_abs, tag = 'smem constant byte address 0x4 - core index']
  #allocation1 [shape = 'u32[144,128]{1,0:T(1,128)}', space=vmem, size = 0x12000, scoped, tag = 'internal scratch']
  %s0 = inlined_call_operand.hbm [shape: f32[2,1024], index: 0, kind: input, shape index: {}]
  %s1 = inlined_call_operand.hbm [shape: f32[2,1024], index: 1, kind: output, shape index: {}]
  %s2 = sld [smem:[#allocation0]]
  $region18: #{tpu_custom_call.1} parent=0
    _
  %s4 = ssub.s32 1, %s2
  %s5 = scalar_select 0, %s4, %s2
  $region1: #{tpu_custom_call.1} parent=0
    #allocation2 [shape = 'u8[8192]{0}', space=vmem, size = 0x2000, scoped, tag = 'input window, operand 0, single buffered']
    #allocation3 [shape = 's32[1]{0}', space=sflag, size = 0x4, scoped, tag = 'scoped memory for tpu_custom_call.1']
    #allocation4 [shape = 's32[1]{0}', space=sflag, size = 0x4, scoped, tag = 'scoped memory for tpu_custom_call.1']
    #allocation5 [shape = 'u8[8192]{0}', space=vmem, size = 0x2000, scoped, tag = 'output window, operand 0, single buffered']
    %6 = vsyncpa [#allocation3], 0
    %7 = vsyncpa [#allocation4], 0
    // Predicated region
    $region2: #{tpu_custom_call.1} parent=1 // pred_check
      _
    $region3: #{tpu_custom_call.1} parent=1 // pred_check_branch
      %9 = sbr.rel (0) target = $region5
    $region4: #{tpu_custom_call.1} parent=1 // pred_region
      %s11 = ssub.s32 256, 256
      %12 = vsyncadd [#allocation3], %s11
      %s14 = sshll.u32 [#allocation2], 4
      %s15 = int_to_ptr.vmem [resolvable:$true] %s14
      %17 = dma.hbm_to_vmem [thread:$0]  %s0, 256, %s15, [#allocation3]
    $region5: #{tpu_custom_call.1} parent=1 // pred_fallthru
      _
    // Predicated region
    $region6: #{tpu_custom_call.1} parent=1 // pred_check
      _
    $region7: #{tpu_custom_call.1} parent=1 // pred_check_branch
      %19 = sbr.rel (0) target = $region9
    $region8: #{tpu_custom_call.1} parent=1 // pred_region
      %20 = dma.done [#allocation3], 256
    $region9: #{tpu_custom_call.1} parent=1 // pred_fallthru
      _
    %v21 = vld [vmem:[#allocation2] sm:$0xff]
    %v22 = vld [vmem:[#allocation2 + $0x8] sm:$0xff]
    %v23 = vsub.f32 0.0, %v21
    %v24 = vsub.f32 0.0, %v22
    %v25 = vmul.f32 %v23, 1.442695
    %v26 = vpow.pop %v25
    %v27 = vmul.f32 %v24, 1.442695
    %v28 = vpow.pop %v27
    %v29 = vadd.f32 %v26, 1.0
    %v30 = vadd.f32 %v28, 1.0
    %v31 = vrcp.pop %v29
    %v32 = vmul.f32 1.0, %v31
    %v33 = vrcp.pop %v30
    %v34 = vmul.f32 1.0, %v33
    %v35 = vmul.f32 %v21, %v32
    %v36 = vmul.f32 %v22, %v34
    %37 = vst [vmem:[#allocation5] sm:$0xff] %v35
    %38 = vst [vmem:[#allocation5 + $0x8] sm:$0xff] %v36
    // Predicated region
    $region10: #{tpu_custom_call.1} parent=1 // pred_check
      _
    $region11: #{tpu_custom_call.1} parent=1 // pred_check_branch
      %40 = sbr.rel (0) target = $region13
    $region12: #{tpu_custom_call.1} parent=1 // pred_region
      %s42 = ssub.s32 256, 256
      %43 = vsyncadd [#allocation4], %s42
      %s45 = sshll.u32 [#allocation5], 4
      %s46 = int_to_ptr.vmem [resolvable:$true] %s45
      %48 = dma.vmem_to_hbm [thread:$0]  %s46, 256, %s1, [#allocation4]
    $region13: #{tpu_custom_call.1} parent=1 // pred_fallthru
      _
    // Predicated region
    $region14: #{tpu_custom_call.1} parent=1 // pred_check
      _
    $region15: #{tpu_custom_call.1} parent=1 // pred_check_branch
      %50 = sbr.rel (0) target = $region17
    $region16: #{tpu_custom_call.1} parent=1 // pred_region
      %51 = dma.done [#allocation4], 256
    $region17: #{tpu_custom_call.1} parent=1 // pred_fallthru
      _
    %52 = vsyncpa [#allocation3], 1
    %53 = vsyncpa [#allocation4], 1

</llo_original>
